<compile_context>
chip_gen: v7x
topology: tpu7x:2x2x1
jax: 0.10.0
libtpu: 0.0.40
codegen_flags: <defaults>
</compile_context>

<pallas_src>
import functools

import jax
import jax.numpy as jnp
from jax.experimental import pallas as pl
from jax.experimental.pallas import tpu as pltpu

LN_EPS = 1e-5   # PyTorch nn.LayerNorm default
LANE = 128


def _round_up(x, m):
    return ((x + m - 1) // m) * m


# --------------------------------------------------------------------------- #
# Kernel
# --------------------------------------------------------------------------- #
def actor_kernel(dims, action_dim,
                 max_ref, x_ref,
                 w1_ref, a1_ref, w2_ref, a2_ref,
                 w3_ref, a3_ref, w4_ref, a4_ref,
                 wh_ref, bh_ref,
                 out_ref):
    """dims = (state_dim, D1, D2, D3, D4) -- the REAL (unpadded) widths."""
    h = x_ref[...]

    # 4 x { Linear -> ReLU -> LayerNorm }, feature dims padded to 128 lanes.
    for w_ref, a_ref, n_real in ((w1_ref, a1_ref, dims[1]),
                                 (w2_ref, a2_ref, dims[2]),
                                 (w3_ref, a3_ref, dims[3]),
                                 (w4_ref, a4_ref, dims[4])):
        aux = a_ref[...]                       # (3, Npad): [bias; gamma; beta]
        h = jnp.dot(h.astype(w_ref.dtype), w_ref[...],
                    preferred_element_type=jnp.float32) + aux[0:1, :]
        h = jnp.maximum(h, 0.0)

        # Single-pass LayerNorm.  Padded lanes of h are exactly zero
        # (zero weights/bias, ReLU(0)=0), so the sums over the padded width
        # are the true sums over the n_real real lanes -- no mask needed.
        inv_n = jnp.float32(1.0 / n_real)
        s1 = jnp.sum(h, axis=-1, keepdims=True)
        s2 = jnp.sum(h * h, axis=-1, keepdims=True)
        mu = s1 * inv_n
        var = jnp.maximum(s2 * inv_n - mu * mu, 0.0)
        # gamma/beta are zero in the padded lanes -> padded lanes stay zero.
        h = (h - mu) * jax.lax.rsqrt(var + LN_EPS) * aux[1:2, :] + aux[2:3, :]

    # Fused heads: columns [0, action_dim) = dist logits, column action_dim =
    # scale logit, remaining (padded) columns are zero-weight.
    bh = bh_ref[...]                           # (2, Hpad): [bias; softmax mask]
    logits = jnp.dot(h.astype(wh_ref.dtype), wh_ref[...],
                     preferred_element_type=jnp.float32) + bh[0:1, :]

    scale = jax.nn.sigmoid(logits[:, action_dim:action_dim + 1])     # (TB, 1)

    # Additive softmax mask: 0 on real logit lanes, -1e30 on scale/pad lanes.
    masked = logits + bh[1:2, :]
    m = jnp.max(masked, axis=-1, keepdims=True)
    e = jnp.exp(masked - m)                    # masked lanes underflow to 0
    denom = jnp.sum(e, axis=-1, keepdims=True)
    r = pl.reciprocal(denom, approx=True)      # EUP slot
    r = r * (2.0 - denom * r)                  # one Newton step -> f32 accuracy

    total_power = scale * max_ref[0, 0]        # maxaction from SMEM scalar
    # Only the real action lanes are written back to HBM.
    out_ref[...] = e[:, :action_dim] * (r * total_power)


# --------------------------------------------------------------------------- #
# Parameter packing / padding (plain JAX, outside the kernel)
# --------------------------------------------------------------------------- #
def pack_params(params, state_dim, action_dim, net_width, *,
                lane=LANE, weight_dtype=jnp.float32):
    dims = [state_dim, net_width, net_width // 2, net_width // 4, net_width // 8]
    # state dim padded to a multiple of 8 (sublane alignment for w1), hidden
    # dims padded to the 128-lane width.
    pdims = [_round_up(state_dim, 8)] + [_round_up(d, lane) for d in dims[1:]]

    packed = {}
    for i in range(4):
        din, dout = dims[i], dims[i + 1]
        pin, pout = pdims[i], pdims[i + 1]
        w = jnp.zeros((pin, pout), weight_dtype)
        w = w.at[:din, :dout].set(params[f"w{i+1}"].astype(weight_dtype))
        aux = jnp.zeros((3, pout), jnp.float32)
        aux = aux.at[0, :dout].set(params[f"b{i+1}"][0])
        aux = aux.at[1, :dout].set(params[f"g{i+1}"][0])
        aux = aux.at[2, :dout].set(params[f"be{i+1}"][0])
        packed[f"w{i+1}"] = w
        packed[f"aux{i+1}"] = aux

    head_pad = _round_up(action_dim + 1, lane)
    d4, p4 = dims[4], pdims[4]
    wh = jnp.zeros((p4, head_pad), weight_dtype)
    wh = wh.at[:d4, :action_dim].set(params["wd"].astype(weight_dtype))
    wh = wh.at[:d4, action_dim:action_dim + 1].set(params["ws"].astype(weight_dtype))
    bh = jnp.zeros((2, head_pad), jnp.float32)
    bh = bh.at[0, :action_dim].set(params["bd"][0])
    bh = bh.at[0, action_dim].set(params["bs"][0, 0])
    bh = bh.at[1, action_dim:].set(-1e30)          # additive softmax mask row
    packed["wh"] = wh
    packed["bh"] = bh
    return packed, tuple(dims), tuple(pdims), head_pad


# --------------------------------------------------------------------------- #
# Wrapper
# --------------------------------------------------------------------------- #
def _pick_tile_b(B, tile_b):
    if B <= 8:
        return B                               # one block == full padded batch
    if B <= tile_b:
        # Split into >=2 sublane-aligned tiles so both v7x TCs get work.
        return _round_up(pl.cdiv(B, 2), 8)
    return tile_b


def actor_forward(state, params, maxaction, *, tile_b=512, use_bf16_weights=False):
    """state: (B, state_dim) f32 -> (B, action_dim) f32."""
    B, state_dim = state.shape
    action_dim = params["wd"].shape[1]
    net_width = params["w1"].shape[1]

    wdt = jnp.bfloat16 if use_bf16_weights else jnp.float32
    packed, dims, pdims, head_pad = pack_params(
        params, state_dim, action_dim, net_width, weight_dtype=wdt)

    TILE_B = _pick_tile_b(B, tile_b)
    B_pad = _round_up(B, TILE_B)
    S_pad = pdims[0]
    x = state
    if B_pad != B or S_pad != state_dim:
        x = jnp.pad(state, ((0, B_pad - B), (0, S_pad - state_dim)))

    max_arr = jnp.full((1, 1), maxaction, jnp.float32)

    args = (max_arr, x,
            packed["w1"], packed["aux1"], packed["w2"], packed["aux2"],
            packed["w3"], packed["aux3"], packed["w4"], packed["aux4"],
            packed["wh"], packed["bh"])

    def const_spec(shape):
        # Constant block index -> stays VMEM-resident across grid steps;
        # Buffered(1) avoids a useless second buffer for never-changing data.
        return pl.BlockSpec(shape, lambda i: (0, 0),
                            pipeline_mode=pl.Buffered(1))

    in_specs = [
        pl.BlockSpec((1, 1), lambda i: (0, 0),
                     memory_space=pltpu.MemorySpace.SMEM),          # maxaction
        pl.BlockSpec((TILE_B, S_pad), lambda i: (i, 0)),            # state tile
        const_spec(packed["w1"].shape), const_spec(packed["aux1"].shape),
        const_spec(packed["w2"].shape), const_spec(packed["aux2"].shape),
        const_spec(packed["w3"].shape), const_spec(packed["aux3"].shape),
        const_spec(packed["w4"].shape), const_spec(packed["aux4"].shape),
        const_spec(packed["wh"].shape), const_spec(packed["bh"].shape),
    ]
    # Output trimmed to the real action_dim (block last dim == full array dim).
    out_specs = pl.BlockSpec((TILE_B, action_dim), lambda i: (i, 0))

    # VMEM budget: single-buffered weights + double-buffered activation tiles,
    # with 2x slack; clamp to [32 MiB, 48 MiB] (v7x scratch headroom).
    weight_bytes = sum(int(v.size) * v.dtype.itemsize for v in packed.values())
    act_bytes = 4 * TILE_B * (S_pad + max(pdims[1:]) + head_pad) * 4
    vmem_limit = int(min(48 * 2**20, max(32 * 2**20, 2 * (weight_bytes + act_bytes))))

    out = pl.pallas_call(
        functools.partial(actor_kernel, dims, action_dim),
        out_shape=jax.ShapeDtypeStruct((B_pad, action_dim), jnp.float32),
        grid=(B_pad // TILE_B,),
        in_specs=in_specs,
        out_specs=out_specs,
        compiler_params=pltpu.CompilerParams(
            dimension_semantics=("parallel",),        # megacore / 2-TC split
            vmem_limit_bytes=vmem_limit),
    )(*args)

    return out if B_pad == B else out[:B]


# --------------------------------------------------------------------------- #
# PyTorch-like parameter init + pure-JAX reference (unpadded)
# --------------------------------------------------------------------------- #
def init_params(key, state_dim, action_dim, net_width):
    dims = [state_dim, net_width, net_width // 2, net_width // 4, net_width // 8]
    params = {}
    keys = jax.random.split(key, 6)

    def linear(k, fan_in, fan_out):
        kw, kb = jax.random.split(k)
        bound = 1.0 / jnp.sqrt(fan_in)
        w = jax.random.uniform(kw, (fan_in, fan_out), jnp.float32, -bound, bound)
        b = jax.random.uniform(kb, (1, fan_out), jnp.float32, -bound, bound)
        return w, b

    for i in range(4):
        w, b = linear(keys[i], dims[i], dims[i + 1])
        params[f"w{i+1}"] = w
        params[f"b{i+1}"] = b
        params[f"g{i+1}"] = jnp.ones((1, dims[i + 1]), jnp.float32)    # LN gamma
        params[f"be{i+1}"] = jnp.zeros((1, dims[i + 1]), jnp.float32)  # LN beta

    params["wd"], params["bd"] = linear(keys[4], dims[4], action_dim)
    params["ws"], params["bs"] = linear(keys[5], dims[4], 1)
    return params


def actor_reference(state, params, maxaction):
    h = state
    for i in range(4):
        h = jnp.maximum(h @ params[f"w{i+1}"] + params[f"b{i+1}"], 0.0)
        mu = jnp.mean(h, axis=-1, keepdims=True)
        var = jnp.mean((h - mu) ** 2, axis=-1, keepdims=True)
        h = (h - mu) / jnp.sqrt(var + LN_EPS) * params[f"g{i+1}"] + params[f"be{i+1}"]
    logits = h @ params["wd"] + params["bd"]
    dist = jax.nn.softmax(logits, axis=-1)
    scale = jax.nn.sigmoid(h @ params["ws"] + params["bs"])[..., 0]
    total_power = scale * maxaction
    return dist * total_power[..., None]


if __name__ == "__main__":
    batch = 2
    state_dim = 16
    action_dim = 4
    net_width = 32
    maxaction = 2.0

    key = jax.random.PRNGKey(0)
    k_params, k_state = jax.random.split(key)
    params = init_params(k_params, state_dim, action_dim, net_width)
    state = jax.random.normal(k_state, (batch, state_dim), jnp.float32)

    out = actor_forward(state, params, maxaction)
    out = jax.block_until_ready(out)

    ref = actor_reference(state, params, maxaction)
    assert out.shape == (batch, action_dim)
    assert jnp.allclose(out, ref, atol=1e-5, rtol=1e-5), (out, ref)

    print("KERNEL_OK")
</pallas_src>

<mosaic_0001>
module attributes {stable_mosaic.version = 11 : i64} {
  func.func @actor_kernel(%arg0: i32, %arg1: memref<1x1xf32, #tpu.memory_space<smem>>, %arg2: memref<2x16xf32, #tpu.memory_space<vmem>>, %arg3: memref<16x128xf32, #tpu.memory_space<vmem>>, %arg4: memref<3x128xf32, #tpu.memory_space<vmem>>, %arg5: memref<128x128xf32, #tpu.memory_space<vmem>>, %arg6: memref<3x128xf32, #tpu.memory_space<vmem>>, %arg7: memref<128x128xf32, #tpu.memory_space<vmem>>, %arg8: memref<3x128xf32, #tpu.memory_space<vmem>>, %arg9: memref<128x128xf32, #tpu.memory_space<vmem>>, %arg10: memref<3x128xf32, #tpu.memory_space<vmem>>, %arg11: memref<128x128xf32, #tpu.memory_space<vmem>>, %arg12: memref<2x128xf32, #tpu.memory_space<vmem>>, %arg13: memref<2x4xf32, #tpu.memory_space<vmem>>) attributes {dimension_semantics = [#tpu.dimension_semantics<parallel>], iteration_bounds = array<i64: 1>, scalar_prefetch = 0 : i64, scratch_operands = 0 : i64, tpu.core_type = #tpu.core_type<tc>, window_params = [{transform_indices = @transform_0, window_bounds = array<i64: 1, 1>}, {transform_indices = @transform_1, window_bounds = array<i64: 2, 16>}, {pipeline_mode = #tpu.pipeline_mode<synchronous>, transform_indices = @transform_2, window_bounds = array<i64: 16, 128>}, {pipeline_mode = #tpu.pipeline_mode<synchronous>, transform_indices = @transform_3, window_bounds = array<i64: 3, 128>}, {pipeline_mode = #tpu.pipeline_mode<synchronous>, transform_indices = @transform_4, window_bounds = array<i64: 128, 128>}, {pipeline_mode = #tpu.pipeline_mode<synchronous>, transform_indices = @transform_5, window_bounds = array<i64: 3, 128>}, {pipeline_mode = #tpu.pipeline_mode<synchronous>, transform_indices = @transform_6, window_bounds = array<i64: 128, 128>}, {pipeline_mode = #tpu.pipeline_mode<synchronous>, transform_indices = @transform_7, window_bounds = array<i64: 3, 128>}, {pipeline_mode = #tpu.pipeline_mode<synchronous>, transform_indices = @transform_8, window_bounds = array<i64: 128, 128>}, {pipeline_mode = #tpu.pipeline_mode<synchronous>, transform_indices = @transform_9, window_bounds = array<i64: 3, 128>}, {pipeline_mode = #tpu.pipeline_mode<synchronous>, transform_indices = @transform_10, window_bounds = array<i64: 128, 128>}, {pipeline_mode = #tpu.pipeline_mode<synchronous>, transform_indices = @transform_11, window_bounds = array<i64: 2, 128>}, {transform_indices = @transform_12, window_bounds = array<i64: 2, 4>}]} {
    %c0 = arith.constant 0 : index
    %c0_0 = arith.constant 0 : index
    %0 = vector.load %arg2[%c0, %c0_0] : memref<2x16xf32, #tpu.memory_space<vmem>>, vector<2x16xf32>
    %c0_1 = arith.constant 0 : index
    %c0_2 = arith.constant 0 : index
    %1 = vector.load %arg4[%c0_1, %c0_2] : memref<3x128xf32, #tpu.memory_space<vmem>>, vector<3x128xf32>
    %c0_3 = arith.constant 0 : index
    %c0_4 = arith.constant 0 : index
    %2 = vector.load %arg3[%c0_3, %c0_4] : memref<16x128xf32, #tpu.memory_space<vmem>>, vector<16x128xf32>
    %cst = arith.constant dense<0.000000e+00> : vector<2x128xf32>
    %3 = tpu.matmul %0, %2, %cst {dimension_numbers = #tpu.dot_dimension_numbers<[1], [0], [0], [1], [0, 0, 1, 1], [], []>} : vector<2x16xf32>, vector<16x128xf32>, vector<2x128xf32> -> vector<2x128xf32>
    %4 = vector.extract_strided_slice %1 {offsets = [0, 0], sizes = [1, 128], strides = [1, 1]} : vector<3x128xf32> to vector<1x128xf32>
    %5 = vector.broadcast %4 : vector<1x128xf32> to vector<2x128xf32>
    %6 = arith.addf %3, %5 : vector<2x128xf32>
    %cst_5 = arith.constant 0.000000e+00 : f32
    %7 = vector.broadcast %cst_5 : f32 to vector<2x128xf32>
    %8 = arith.maximumf %6, %7 : vector<2x128xf32>
    %cst_6 = arith.constant dense<0.000000e+00> : vector<2xf32>
    %9 = vector.multi_reduction <add>, %8, %cst_6 [1] : vector<2x128xf32> to vector<2xf32>
    %10 = vector.shape_cast %9 : vector<2xf32> to vector<2x1xf32>
    %11 = arith.mulf %8, %8 : vector<2x128xf32>
    %cst_7 = arith.constant dense<0.000000e+00> : vector<2xf32>
    %12 = vector.multi_reduction <add>, %11, %cst_7 [1] : vector<2x128xf32> to vector<2xf32>
    %13 = vector.shape_cast %12 : vector<2xf32> to vector<2x1xf32>
    %cst_8 = arith.constant 3.125000e-02 : f32
    %14 = vector.broadcast %cst_8 : f32 to vector<2x1xf32>
    %15 = arith.mulf %10, %14 : vector<2x1xf32>
    %cst_9 = arith.constant 3.125000e-02 : f32
    %16 = vector.broadcast %cst_9 : f32 to vector<2x1xf32>
    %17 = arith.mulf %13, %16 : vector<2x1xf32>
    %18 = arith.mulf %15, %15 : vector<2x1xf32>
    %19 = arith.subf %17, %18 : vector<2x1xf32>
    %cst_10 = arith.constant 0.000000e+00 : f32
    %20 = vector.broadcast %cst_10 : f32 to vector<2x1xf32>
    %21 = arith.maximumf %19, %20 : vector<2x1xf32>
    %22 = vector.broadcast %15 : vector<2x1xf32> to vector<2x128xf32>
    %23 = arith.subf %8, %22 : vector<2x128xf32>
    %cst_11 = arith.constant 9.99999974E-6 : f32
    %24 = vector.broadcast %cst_11 : f32 to vector<2x1xf32>
    %25 = arith.addf %21, %24 : vector<2x1xf32>
    %26 = math.rsqrt %25 : vector<2x1xf32>
    %27 = vector.broadcast %26 : vector<2x1xf32> to vector<2x128xf32>
    %28 = arith.mulf %23, %27 : vector<2x128xf32>
    %29 = vector.extract_strided_slice %1 {offsets = [1, 0], sizes = [1, 128], strides = [1, 1]} : vector<3x128xf32> to vector<1x128xf32>
    %30 = vector.broadcast %29 : vector<1x128xf32> to vector<2x128xf32>
    %31 = arith.mulf %28, %30 : vector<2x128xf32>
    %32 = vector.extract_strided_slice %1 {offsets = [2, 0], sizes = [1, 128], strides = [1, 1]} : vector<3x128xf32> to vector<1x128xf32>
    %33 = vector.broadcast %32 : vector<1x128xf32> to vector<2x128xf32>
    %34 = arith.addf %31, %33 : vector<2x128xf32>
    %c0_12 = arith.constant 0 : index
    %c0_13 = arith.constant 0 : index
    %35 = vector.load %arg6[%c0_12, %c0_13] : memref<3x128xf32, #tpu.memory_space<vmem>>, vector<3x128xf32>
    %c0_14 = arith.constant 0 : index
    %c0_15 = arith.constant 0 : index
    %36 = vector.load %arg5[%c0_14, %c0_15] : memref<128x128xf32, #tpu.memory_space<vmem>>, vector<128x128xf32>
    %cst_16 = arith.constant dense<0.000000e+00> : vector<2x128xf32>
    %37 = tpu.matmul %34, %36, %cst_16 {dimension_numbers = #tpu.dot_dimension_numbers<[1], [0], [0], [1], [0, 0, 1, 1], [], []>} : vector<2x128xf32>, vector<128x128xf32>, vector<2x128xf32> -> vector<2x128xf32>
    %38 = vector.extract_strided_slice %35 {offsets = [0, 0], sizes = [1, 128], strides = [1, 1]} : vector<3x128xf32> to vector<1x128xf32>
    %39 = vector.broadcast %38 : vector<1x128xf32> to vector<2x128xf32>
    %40 = arith.addf %37, %39 : vector<2x128xf32>
    %cst_17 = arith.constant 0.000000e+00 : f32
    %41 = vector.broadcast %cst_17 : f32 to vector<2x128xf32>
    %42 = arith.maximumf %40, %41 : vector<2x128xf32>
    %cst_18 = arith.constant dense<0.000000e+00> : vector<2xf32>
    %43 = vector.multi_reduction <add>, %42, %cst_18 [1] : vector<2x128xf32> to vector<2xf32>
    %44 = vector.shape_cast %43 : vector<2xf32> to vector<2x1xf32>
    %45 = arith.mulf %42, %42 : vector<2x128xf32>
    %cst_19 = arith.constant dense<0.000000e+00> : vector<2xf32>
    %46 = vector.multi_reduction <add>, %45, %cst_19 [1] : vector<2x128xf32> to vector<2xf32>
    %47 = vector.shape_cast %46 : vector<2xf32> to vector<2x1xf32>
    %cst_20 = arith.constant 6.250000e-02 : f32
    %48 = vector.broadcast %cst_20 : f32 to vector<2x1xf32>
    %49 = arith.mulf %44, %48 : vector<2x1xf32>
    %cst_21 = arith.constant 6.250000e-02 : f32
    %50 = vector.broadcast %cst_21 : f32 to vector<2x1xf32>
    %51 = arith.mulf %47, %50 : vector<2x1xf32>
    %52 = arith.mulf %49, %49 : vector<2x1xf32>
    %53 = arith.subf %51, %52 : vector<2x1xf32>
    %cst_22 = arith.constant 0.000000e+00 : f32
    %54 = vector.broadcast %cst_22 : f32 to vector<2x1xf32>
    %55 = arith.maximumf %53, %54 : vector<2x1xf32>
    %56 = vector.broadcast %49 : vector<2x1xf32> to vector<2x128xf32>
    %57 = arith.subf %42, %56 : vector<2x128xf32>
    %cst_23 = arith.constant 9.99999974E-6 : f32
    %58 = vector.broadcast %cst_23 : f32 to vector<2x1xf32>
    %59 = arith.addf %55, %58 : vector<2x1xf32>
    %60 = math.rsqrt %59 : vector<2x1xf32>
    %61 = vector.broadcast %60 : vector<2x1xf32> to vector<2x128xf32>
    %62 = arith.mulf %57, %61 : vector<2x128xf32>
    %63 = vector.extract_strided_slice %35 {offsets = [1, 0], sizes = [1, 128], strides = [1, 1]} : vector<3x128xf32> to vector<1x128xf32>
    %64 = vector.broadcast %63 : vector<1x128xf32> to vector<2x128xf32>
    %65 = arith.mulf %62, %64 : vector<2x128xf32>
    %66 = vector.extract_strided_slice %35 {offsets = [2, 0], sizes = [1, 128], strides = [1, 1]} : vector<3x128xf32> to vector<1x128xf32>
    %67 = vector.broadcast %66 : vector<1x128xf32> to vector<2x128xf32>
    %68 = arith.addf %65, %67 : vector<2x128xf32>
    %c0_24 = arith.constant 0 : index
    %c0_25 = arith.constant 0 : index
    %69 = vector.load %arg8[%c0_24, %c0_25] : memref<3x128xf32, #tpu.memory_space<vmem>>, vector<3x128xf32>
    %c0_26 = arith.constant 0 : index
    %c0_27 = arith.constant 0 : index
    %70 = vector.load %arg7[%c0_26, %c0_27] : memref<128x128xf32, #tpu.memory_space<vmem>>, vector<128x128xf32>
    %cst_28 = arith.constant dense<0.000000e+00> : vector<2x128xf32>
    %71 = tpu.matmul %68, %70, %cst_28 {dimension_numbers = #tpu.dot_dimension_numbers<[1], [0], [0], [1], [0, 0, 1, 1], [], []>} : vector<2x128xf32>, vector<128x128xf32>, vector<2x128xf32> -> vector<2x128xf32>
    %72 = vector.extract_strided_slice %69 {offsets = [0, 0], sizes = [1, 128], strides = [1, 1]} : vector<3x128xf32> to vector<1x128xf32>
    %73 = vector.broadcast %72 : vector<1x128xf32> to vector<2x128xf32>
    %74 = arith.addf %71, %73 : vector<2x128xf32>
    %cst_29 = arith.constant 0.000000e+00 : f32
    %75 = vector.broadcast %cst_29 : f32 to vector<2x128xf32>
    %76 = arith.maximumf %74, %75 : vector<2x128xf32>
    %cst_30 = arith.constant dense<0.000000e+00> : vector<2xf32>
    %77 = vector.multi_reduction <add>, %76, %cst_30 [1] : vector<2x128xf32> to vector<2xf32>
    %78 = vector.shape_cast %77 : vector<2xf32> to vector<2x1xf32>
    %79 = arith.mulf %76, %76 : vector<2x128xf32>
    %cst_31 = arith.constant dense<0.000000e+00> : vector<2xf32>
    %80 = vector.multi_reduction <add>, %79, %cst_31 [1] : vector<2x128xf32> to vector<2xf32>
    %81 = vector.shape_cast %80 : vector<2xf32> to vector<2x1xf32>
    %cst_32 = arith.constant 1.250000e-01 : f32
    %82 = vector.broadcast %cst_32 : f32 to vector<2x1xf32>
    %83 = arith.mulf %78, %82 : vector<2x1xf32>
    %cst_33 = arith.constant 1.250000e-01 : f32
    %84 = vector.broadcast %cst_33 : f32 to vector<2x1xf32>
    %85 = arith.mulf %81, %84 : vector<2x1xf32>
    %86 = arith.mulf %83, %83 : vector<2x1xf32>
    %87 = arith.subf %85, %86 : vector<2x1xf32>
    %cst_34 = arith.constant 0.000000e+00 : f32
    %88 = vector.broadcast %cst_34 : f32 to vector<2x1xf32>
    %89 = arith.maximumf %87, %88 : vector<2x1xf32>
    %90 = vector.broadcast %83 : vector<2x1xf32> to vector<2x128xf32>
    %91 = arith.subf %76, %90 : vector<2x128xf32>
    %cst_35 = arith.constant 9.99999974E-6 : f32
    %92 = vector.broadcast %cst_35 : f32 to vector<2x1xf32>
    %93 = arith.addf %89, %92 : vector<2x1xf32>
    %94 = math.rsqrt %93 : vector<2x1xf32>
    %95 = vector.broadcast %94 : vector<2x1xf32> to vector<2x128xf32>
    %96 = arith.mulf %91, %95 : vector<2x128xf32>
    %97 = vector.extract_strided_slice %69 {offsets = [1, 0], sizes = [1, 128], strides = [1, 1]} : vector<3x128xf32> to vector<1x128xf32>
    %98 = vector.broadcast %97 : vector<1x128xf32> to vector<2x128xf32>
    %99 = arith.mulf %96, %98 : vector<2x128xf32>
    %100 = vector.extract_strided_slice %69 {offsets = [2, 0], sizes = [1, 128], strides = [1, 1]} : vector<3x128xf32> to vector<1x128xf32>
    %101 = vector.broadcast %100 : vector<1x128xf32> to vector<2x128xf32>
    %102 = arith.addf %99, %101 : vector<2x128xf32>
    %c0_36 = arith.constant 0 : index
    %c0_37 = arith.constant 0 : index
    %103 = vector.load %arg10[%c0_36, %c0_37] : memref<3x128xf32, #tpu.memory_space<vmem>>, vector<3x128xf32>
    %c0_38 = arith.constant 0 : index
    %c0_39 = arith.constant 0 : index
    %104 = vector.load %arg9[%c0_38, %c0_39] : memref<128x128xf32, #tpu.memory_space<vmem>>, vector<128x128xf32>
    %cst_40 = arith.constant dense<0.000000e+00> : vector<2x128xf32>
    %105 = tpu.matmul %102, %104, %cst_40 {dimension_numbers = #tpu.dot_dimension_numbers<[1], [0], [0], [1], [0, 0, 1, 1], [], []>} : vector<2x128xf32>, vector<128x128xf32>, vector<2x128xf32> -> vector<2x128xf32>
    %106 = vector.extract_strided_slice %103 {offsets = [0, 0], sizes = [1, 128], strides = [1, 1]} : vector<3x128xf32> to vector<1x128xf32>
    %107 = vector.broadcast %106 : vector<1x128xf32> to vector<2x128xf32>
    %108 = arith.addf %105, %107 : vector<2x128xf32>
    %cst_41 = arith.constant 0.000000e+00 : f32
    %109 = vector.broadcast %cst_41 : f32 to vector<2x128xf32>
    %110 = arith.maximumf %108, %109 : vector<2x128xf32>
    %cst_42 = arith.constant dense<0.000000e+00> : vector<2xf32>
    %111 = vector.multi_reduction <add>, %110, %cst_42 [1] : vector<2x128xf32> to vector<2xf32>
    %112 = vector.shape_cast %111 : vector<2xf32> to vector<2x1xf32>
    %113 = arith.mulf %110, %110 : vector<2x128xf32>
    %cst_43 = arith.constant dense<0.000000e+00> : vector<2xf32>
    %114 = vector.multi_reduction <add>, %113, %cst_43 [1] : vector<2x128xf32> to vector<2xf32>
    %115 = vector.shape_cast %114 : vector<2xf32> to vector<2x1xf32>
    %cst_44 = arith.constant 2.500000e-01 : f32
    %116 = vector.broadcast %cst_44 : f32 to vector<2x1xf32>
    %117 = arith.mulf %112, %116 : vector<2x1xf32>
    %cst_45 = arith.constant 2.500000e-01 : f32
    %118 = vector.broadcast %cst_45 : f32 to vector<2x1xf32>
    %119 = arith.mulf %115, %118 : vector<2x1xf32>
    %120 = arith.mulf %117, %117 : vector<2x1xf32>
    %121 = arith.subf %119, %120 : vector<2x1xf32>
    %cst_46 = arith.constant 0.000000e+00 : f32
    %122 = vector.broadcast %cst_46 : f32 to vector<2x1xf32>
    %123 = arith.maximumf %121, %122 : vector<2x1xf32>
    %124 = vector.broadcast %117 : vector<2x1xf32> to vector<2x128xf32>
    %125 = arith.subf %110, %124 : vector<2x128xf32>
    %cst_47 = arith.constant 9.99999974E-6 : f32
    %126 = vector.broadcast %cst_47 : f32 to vector<2x1xf32>
    %127 = arith.addf %123, %126 : vector<2x1xf32>
    %128 = math.rsqrt %127 : vector<2x1xf32>
    %129 = vector.broadcast %128 : vector<2x1xf32> to vector<2x128xf32>
    %130 = arith.mulf %125, %129 : vector<2x128xf32>
    %131 = vector.extract_strided_slice %103 {offsets = [1, 0], sizes = [1, 128], strides = [1, 1]} : vector<3x128xf32> to vector<1x128xf32>
    %132 = vector.broadcast %131 : vector<1x128xf32> to vector<2x128xf32>
    %133 = arith.mulf %130, %132 : vector<2x128xf32>
    %134 = vector.extract_strided_slice %103 {offsets = [2, 0], sizes = [1, 128], strides = [1, 1]} : vector<3x128xf32> to vector<1x128xf32>
    %135 = vector.broadcast %134 : vector<1x128xf32> to vector<2x128xf32>
    %136 = arith.addf %133, %135 : vector<2x128xf32>
    %c0_48 = arith.constant 0 : index
    %c0_49 = arith.constant 0 : index
    %137 = vector.load %arg12[%c0_48, %c0_49] : memref<2x128xf32, #tpu.memory_space<vmem>>, vector<2x128xf32>
    %c0_50 = arith.constant 0 : index
    %c0_51 = arith.constant 0 : index
    %138 = vector.load %arg11[%c0_50, %c0_51] : memref<128x128xf32, #tpu.memory_space<vmem>>, vector<128x128xf32>
    %cst_52 = arith.constant dense<0.000000e+00> : vector<2x128xf32>
    %139 = tpu.matmul %136, %138, %cst_52 {dimension_numbers = #tpu.dot_dimension_numbers<[1], [0], [0], [1], [0, 0, 1, 1], [], []>} : vector<2x128xf32>, vector<128x128xf32>, vector<2x128xf32> -> vector<2x128xf32>
    %140 = vector.extract_strided_slice %137 {offsets = [0, 0], sizes = [1, 128], strides = [1, 1]} : vector<2x128xf32> to vector<1x128xf32>
    %141 = vector.broadcast %140 : vector<1x128xf32> to vector<2x128xf32>
    %142 = arith.addf %139, %141 : vector<2x128xf32>
    %143 = vector.extract_strided_slice %142 {offsets = [0, 4], sizes = [2, 1], strides = [1, 1]} : vector<2x128xf32> to vector<2x1xf32>
    %144 = arith.negf %143 : vector<2x1xf32>
    %145 = math.exp %144 : vector<2x1xf32>
    %cst_53 = arith.constant 1.000000e+00 : f32
    %146 = vector.broadcast %cst_53 : f32 to vector<2x1xf32>
    %147 = arith.addf %146, %145 : vector<2x1xf32>
    %148 = arith.divf %146, %147 : vector<2x1xf32>
    %149 = vector.extract_strided_slice %137 {offsets = [1, 0], sizes = [1, 128], strides = [1, 1]} : vector<2x128xf32> to vector<1x128xf32>
    %150 = vector.broadcast %149 : vector<1x128xf32> to vector<2x128xf32>
    %151 = arith.addf %142, %150 : vector<2x128xf32>
    %cst_54 = arith.constant dense<0xFF800000> : vector<2xf32>
    %152 = vector.multi_reduction <maximumf>, %151, %cst_54 [1] : vector<2x128xf32> to vector<2xf32>
    %153 = vector.shape_cast %152 : vector<2xf32> to vector<2x1xf32>
    %154 = vector.broadcast %153 : vector<2x1xf32> to vector<2x128xf32>
    %155 = arith.subf %151, %154 : vector<2x128xf32>
    %156 = math.exp %155 : vector<2x128xf32>
    %cst_55 = arith.constant dense<0.000000e+00> : vector<2xf32>
    %157 = vector.multi_reduction <add>, %156, %cst_55 [1] : vector<2x128xf32> to vector<2xf32>
    %158 = vector.shape_cast %157 : vector<2xf32> to vector<2x1xf32>
    %159 = tpu.reciprocal %158 {approx = true} : vector<2x1xf32> -> vector<2x1xf32>
    %160 = arith.mulf %158, %159 : vector<2x1xf32>
    %cst_56 = arith.constant 2.000000e+00 : f32
    %161 = vector.broadcast %cst_56 : f32 to vector<2x1xf32>
    %162 = arith.subf %161, %160 : vector<2x1xf32>
    %163 = arith.mulf %159, %162 : vector<2x1xf32>
    %c0_57 = arith.constant 0 : index
    %c0_58 = arith.constant 0 : index
    %164 = memref.load %arg1[%c0_57, %c0_58] : memref<1x1xf32, #tpu.memory_space<smem>>
    %165 = vector.broadcast %164 : f32 to vector<2x1xf32>
    %166 = arith.mulf %148, %165 : vector<2x1xf32>
    %167 = vector.extract_strided_slice %156 {offsets = [0, 0], sizes = [2, 4], strides = [1, 1]} : vector<2x128xf32> to vector<2x4xf32>
    %168 = arith.mulf %163, %166 : vector<2x1xf32>
    %169 = vector.broadcast %168 : vector<2x1xf32> to vector<2x4xf32>
    %170 = arith.mulf %167, %169 : vector<2x4xf32>
    %c0_59 = arith.constant 0 : index
    %c0_60 = arith.constant 0 : index
    %171 = vector.load %arg13[%c0_59, %c0_60] : memref<2x4xf32, #tpu.memory_space<vmem>>, vector<2x4xf32>
    tpu.vector_store %arg13[%c0_59, %c0_60], %170 {strides = array<i32>} : memref<2x4xf32, #tpu.memory_space<vmem>>, vector<2x4xf32>,
    return
  }
  func.func @transform_0(%arg0: i32) -> (i32, i32) {
    %c0_i32 = arith.constant 0 : i32
    %c0_i32_0 = arith.constant 0 : i32
    %c0_i32_1 = arith.constant 0 : i32
    return %c0_i32, %c0_i32_0 : i32, i32
  }
  func.func @transform_1(%arg0: i32) -> (i32, i32) {
    %c0_i32 = arith.constant 0 : i32
    %c0_i32_0 = arith.constant 0 : i32
    return %arg0, %c0_i32 : i32, i32
  }
  func.func @transform_2(%arg0: i32) -> (i32, i32) {
    %c0_i32 = arith.constant 0 : i32
    %c0_i32_0 = arith.constant 0 : i32
    %c0_i32_1 = arith.constant 0 : i32
    return %c0_i32, %c0_i32_0 : i32, i32
  }
  func.func @transform_3(%arg0: i32) -> (i32, i32) {
    %c0_i32 = arith.constant 0 : i32
    %c0_i32_0 = arith.constant 0 : i32
    %c0_i32_1 = arith.constant 0 : i32
    return %c0_i32, %c0_i32_0 : i32, i32
  }
  func.func @transform_4(%arg0: i32) -> (i32, i32) {
    %c0_i32 = arith.constant 0 : i32
    %c0_i32_0 = arith.constant 0 : i32
    %c0_i32_1 = arith.constant 0 : i32
    return %c0_i32, %c0_i32_0 : i32, i32
  }
  func.func @transform_5(%arg0: i32) -> (i32, i32) {
    %c0_i32 = arith.constant 0 : i32
    %c0_i32_0 = arith.constant 0 : i32
    %c0_i32_1 = arith.constant 0 : i32
    return %c0_i32, %c0_i32_0 : i32, i32
  }
  func.func @transform_6(%arg0: i32) -> (i32, i32) {
    %c0_i32 = arith.constant 0 : i32
    %c0_i32_0 = arith.constant 0 : i32
    %c0_i32_1 = arith.constant 0 : i32
    return %c0_i32, %c0_i32_0 : i32, i32
  }
  func.func @transform_7(%arg0: i32) -> (i32, i32) {
    %c0_i32 = arith.constant 0 : i32
    %c0_i32_0 = arith.constant 0 : i32
    %c0_i32_1 = arith.constant 0 : i32
    return %c0_i32, %c0_i32_0 : i32, i32
  }
  func.func @transform_8(%arg0: i32) -> (i32, i32) {
    %c0_i32 = arith.constant 0 : i32
    %c0_i32_0 = arith.constant 0 : i32
    %c0_i32_1 = arith.constant 0 : i32
    return %c0_i32, %c0_i32_0 : i32, i32
  }
  func.func @transform_9(%arg0: i32) -> (i32, i32) {
    %c0_i32 = arith.constant 0 : i32
    %c0_i32_0 = arith.constant 0 : i32
    %c0_i32_1 = arith.constant 0 : i32
    return %c0_i32, %c0_i32_0 : i32, i32
  }
  func.func @transform_10(%arg0: i32) -> (i32, i32) {
    %c0_i32 = arith.constant 0 : i32
    %c0_i32_0 = arith.constant 0 : i32
    %c0_i32_1 = arith.constant 0 : i32
    return %c0_i32, %c0_i32_0 : i32, i32
  }
  func.func @transform_11(%arg0: i32) -> (i32, i32) {
    %c0_i32 = arith.constant 0 : i32
    %c0_i32_0 = arith.constant 0 : i32
    %c0_i32_1 = arith.constant 0 : i32
    return %c0_i32, %c0_i32_0 : i32, i32
  }
  func.func @transform_12(%arg0: i32) -> (i32, i32) {
    %c0_i32 = arith.constant 0 : i32
    %c0_i32_0 = arith.constant 0 : i32
    return %arg0, %c0_i32 : i32, i32
  }
}

</mosaic_0001>

<llo_original>
// kernel: tpu_custom_call.1
$region0: #{tpu_custom_call.1}
  #allocation0 [shape = 'u32[]', space=smem, size = 0x4, offset = 0x4, fixed_abs, tag = 'smem constant byte address 0x4 - core index']
  #allocation1 [shape = 'u32[144,128]{1,0:T(1,128)}', space=vmem, size = 0x12000, scoped, tag = 'internal scratch']
  #allocation2 [shape = 'f32[1,1]{1,0:T(1,128)S(6)}', space=smem, size = 0x200, scoped, tag = 'scoped memory for tpu_custom_call.1']
  %s0 = inlined_call_operand.<no memory space> [shape: f32[1,1], index: 0, kind: input, shape index: {}]
  %s1 = inlined_call_operand.vmem [shape: f32[2,16], index: 1, kind: input, shape index: {}]
  %s2 = inlined_call_operand.hbm [shape: f32[16,128], index: 2, kind: input, shape index: {}]
  %s3 = inlined_call_operand.vmem [shape: f32[3,128], index: 3, kind: input, shape index: {}]
  %s4 = inlined_call_operand.hbm [shape: f32[128,128], index: 4, kind: input, shape index: {}]
  %s5 = inlined_call_operand.vmem [shape: f32[3,128], index: 5, kind: input, shape index: {}]
  %s6 = inlined_call_operand.hbm [shape: f32[128,128], index: 6, kind: input, shape index: {}]
  %s7 = inlined_call_operand.vmem [shape: f32[3,128], index: 7, kind: input, shape index: {}]
  %s8 = inlined_call_operand.hbm [shape: f32[128,128], index: 8, kind: input, shape index: {}]
  %s9 = inlined_call_operand.vmem [shape: f32[3,128], index: 9, kind: input, shape index: {}]
  %s10 = inlined_call_operand.hbm [shape: f32[128,128], index: 10, kind: input, shape index: {}]
  %s11 = inlined_call_operand.vmem [shape: f32[2,128], index: 11, kind: input, shape index: {}]
  %s12 = inlined_call_operand.hbm [shape: f32[2,4], index: 12, kind: output, shape index: {}]
  %s13 = sld [smem:[#allocation0]]
  $region78: #{tpu_custom_call.1} parent=0
    _
  %s15 = ssub.s32 1, %s13
  %s16 = scalar_select 0, %s15, %s13
  %17 = sst [smem:[#allocation2]] %s0
  $region1: #{tpu_custom_call.1} parent=0
    #allocation3 [shape = 'u8[8192]{0}', space=vmem, size = 0x2000, scoped, tag = 'input window, operand 2, single buffered']
    #allocation4 [shape = 's32[1]{0}', space=sflag, size = 0x4, scoped, tag = 'scoped memory for tpu_custom_call.1']
    #allocation5 [shape = 's32[1]{0}', space=sflag, size = 0x4, scoped, tag = 'scoped memory for tpu_custom_call.1']
    #allocation6 [shape = 'u8[65536]{0}', space=vmem, size = 0x10000, scoped, tag = 'input window, operand 4, single buffered']
    #allocation7 [shape = 's32[1]{0}', space=sflag, size = 0x4, scoped, tag = 'scoped memory for tpu_custom_call.1']
    #allocation8 [shape = 'u8[65536]{0}', space=vmem, size = 0x10000, scoped, tag = 'input window, operand 6, single buffered']
    #allocation9 [shape = 'u8[65536]{0}', space=vmem, size = 0x10000, scoped, tag = 'input window, operand 8, single buffered']
    #allocation10 [shape = 's32[1]{0}', space=sflag, size = 0x4, scoped, tag = 'scoped memory for tpu_custom_call.1']
    #allocation11 [shape = 'u8[65536]{0}', space=vmem, size = 0x10000, scoped, tag = 'input window, operand 10, single buffered']
    #allocation12 [shape = 'u8[1024]{0}', space=vmem, size = 0x400, scoped, tag = 'output window, operand 0, single buffered']
    %18 = vsyncpa [#allocation4], 0
    %19 = vsyncpa [#allocation7], 0
    %20 = vsyncpa [#allocation10], 0
    %21 = vsyncpa [#allocation5], 0
    // Predicated region
    $region2: #{tpu_custom_call.1} parent=1 // pred_check
      _
    $region3: #{tpu_custom_call.1} parent=1 // pred_check_branch
      %23 = sbr.rel (0) target = $region5
    $region4: #{tpu_custom_call.1} parent=1 // pred_region
      _
    $region5: #{tpu_custom_call.1} parent=1 // pred_fallthru
      _
    // Predicated region
    $region6: #{tpu_custom_call.1} parent=1 // pred_check
      _
    $region7: #{tpu_custom_call.1} parent=1 // pred_check_branch
      %25 = sbr.rel (0) target = $region9
    $region8: #{tpu_custom_call.1} parent=1 // pred_region
      _
    $region9: #{tpu_custom_call.1} parent=1 // pred_fallthru
      _
    // Predicated region
    $region10: #{tpu_custom_call.1} parent=1 // pred_check
      _
    $region11: #{tpu_custom_call.1} parent=1 // pred_check_branch
      %27 = sbr.rel (0) target = $region13
    $region12: #{tpu_custom_call.1} parent=1 // pred_region
      %s29 = ssub.s32 256, 256
      %30 = vsyncadd [#allocation4], %s29
      %s31 = sshll.u32 [#allocation3], 4
      %s32 = int_to_ptr.vmem [resolvable:$true] %s31
      %37 = dma.hbm_to_vmem [thread:$0]  %s2, 256, %s32, [#allocation4], 128, 128, 8
    $region13: #{tpu_custom_call.1} parent=1 // pred_fallthru
      _
    // Predicated region
    $region14: #{tpu_custom_call.1} parent=1 // pred_check
      _
    $region15: #{tpu_custom_call.1} parent=1 // pred_check_branch
      %39 = sbr.rel (0) target = $region17
    $region16: #{tpu_custom_call.1} parent=1 // pred_region
      _
    $region17: #{tpu_custom_call.1} parent=1 // pred_fallthru
      _
    // Predicated region
    $region18: #{tpu_custom_call.1} parent=1 // pred_check
      _
    $region19: #{tpu_custom_call.1} parent=1 // pred_check_branch
      %41 = sbr.rel (0) target = $region21
    $region20: #{tpu_custom_call.1} parent=1 // pred_region
      %s43 = ssub.s32 2048, 2048
      %44 = vsyncadd [#allocation7], %s43
      %s45 = sshll.u32 [#allocation6], 4
      %s46 = int_to_ptr.vmem [resolvable:$true] %s45
      %51 = dma.hbm_to_vmem [thread:$0]  %s4, 2048, %s46, [#allocation7], 128, 128, 8
    $region21: #{tpu_custom_call.1} parent=1 // pred_fallthru
      _
    // Predicated region
    $region22: #{tpu_custom_call.1} parent=1 // pred_check
      _
    $region23: #{tpu_custom_call.1} parent=1 // pred_check_branch
      %53 = sbr.rel (0) target = $region25
    $region24: #{tpu_custom_call.1} parent=1 // pred_region
      _
    $region25: #{tpu_custom_call.1} parent=1 // pred_fallthru
      _
    // Predicated region
    $region26: #{tpu_custom_call.1} parent=1 // pred_check
      _
    $region27: #{tpu_custom_call.1} parent=1 // pred_check_branch
      %55 = sbr.rel (0) target = $region29
    $region28: #{tpu_custom_call.1} parent=1 // pred_region
      %s57 = ssub.s32 2048, 2048
      %58 = vsyncadd [#allocation7], %s57
      %s59 = sshll.u32 [#allocation8], 4
      %s60 = int_to_ptr.vmem [resolvable:$true] %s59
      %65 = dma.hbm_to_vmem [thread:$0]  %s6, 2048, %s60, [#allocation7], 128, 128, 8
    $region29: #{tpu_custom_call.1} parent=1 // pred_fallthru
      _
    // Predicated region
    $region30: #{tpu_custom_call.1} parent=1 // pred_check
      _
    $region31: #{tpu_custom_call.1} parent=1 // pred_check_branch
      %67 = sbr.rel (0) target = $region33
    $region32: #{tpu_custom_call.1} parent=1 // pred_region
      _
    $region33: #{tpu_custom_call.1} parent=1 // pred_fallthru
      _
    // Predicated region
    $region34: #{tpu_custom_call.1} parent=1 // pred_check
      _
    $region35: #{tpu_custom_call.1} parent=1 // pred_check_branch
      %69 = sbr.rel (0) target = $region37
    $region36: #{tpu_custom_call.1} parent=1 // pred_region
      %s71 = ssub.s32 2048, 2048
      %72 = vsyncadd [#allocation10], %s71
      %s73 = sshll.u32 [#allocation9], 4
      %s74 = int_to_ptr.vmem [resolvable:$true] %s73
      %79 = dma.hbm_to_vmem [thread:$0]  %s8, 2048, %s74, [#allocation10], 128, 128, 8
    $region37: #{tpu_custom_call.1} parent=1 // pred_fallthru
      _
    // Predicated region
    $region38: #{tpu_custom_call.1} parent=1 // pred_check
      _
    $region39: #{tpu_custom_call.1} parent=1 // pred_check_branch
      %81 = sbr.rel (0) target = $region41
    $region40: #{tpu_custom_call.1} parent=1 // pred_region
      _
    $region41: #{tpu_custom_call.1} parent=1 // pred_fallthru
      _
    // Predicated region
    $region42: #{tpu_custom_call.1} parent=1 // pred_check
      _
    $region43: #{tpu_custom_call.1} parent=1 // pred_check_branch
      %83 = sbr.rel (0) target = $region45
    $region44: #{tpu_custom_call.1} parent=1 // pred_region
      %s85 = ssub.s32 2048, 2048
      %86 = vsyncadd [#allocation10], %s85
      %s87 = sshll.u32 [#allocation11], 4
      %s88 = int_to_ptr.vmem [resolvable:$true] %s87
      %93 = dma.hbm_to_vmem [thread:$0]  %s10, 2048, %s88, [#allocation10], 128, 128, 8
    $region45: #{tpu_custom_call.1} parent=1 // pred_fallthru
      _
    // Predicated region
    $region46: #{tpu_custom_call.1} parent=1 // pred_check
      _
    $region47: #{tpu_custom_call.1} parent=1 // pred_check_branch
      %95 = sbr.rel (0) target = $region49
    $region48: #{tpu_custom_call.1} parent=1 // pred_region
      _
    $region49: #{tpu_custom_call.1} parent=1 // pred_fallthru
      _
    // Predicated region
    $region50: #{tpu_custom_call.1} parent=1 // pred_check
      _
    $region51: #{tpu_custom_call.1} parent=1 // pred_check_branch
      %97 = sbr.rel (0) target = $region53
    $region52: #{tpu_custom_call.1} parent=1 // pred_region
      %98 = dma.done [#allocation4], 256
    $region53: #{tpu_custom_call.1} parent=1 // pred_fallthru
      _
    // Predicated region
    $region54: #{tpu_custom_call.1} parent=1 // pred_check
      _
    $region55: #{tpu_custom_call.1} parent=1 // pred_check_branch
      %100 = sbr.rel (0) target = $region57
    $region56: #{tpu_custom_call.1} parent=1 // pred_region
      %101 = dma.done [#allocation7], 2048
    $region57: #{tpu_custom_call.1} parent=1 // pred_fallthru
      _
    // Predicated region
    $region58: #{tpu_custom_call.1} parent=1 // pred_check
      _
    $region59: #{tpu_custom_call.1} parent=1 // pred_check_branch
      %103 = sbr.rel (0) target = $region61
    $region60: #{tpu_custom_call.1} parent=1 // pred_region
      %104 = dma.done [#allocation7], 2048
    $region61: #{tpu_custom_call.1} parent=1 // pred_fallthru
      _
    // Predicated region
    $region62: #{tpu_custom_call.1} parent=1 // pred_check
      _
    $region63: #{tpu_custom_call.1} parent=1 // pred_check_branch
      %106 = sbr.rel (0) target = $region65
    $region64: #{tpu_custom_call.1} parent=1 // pred_region
      %107 = dma.done [#allocation10], 2048
    $region65: #{tpu_custom_call.1} parent=1 // pred_fallthru
      _
    // Predicated region
    $region66: #{tpu_custom_call.1} parent=1 // pred_check
      _
    $region67: #{tpu_custom_call.1} parent=1 // pred_check_branch
      %109 = sbr.rel (0) target = $region69
    $region68: #{tpu_custom_call.1} parent=1 // pred_region
      %110 = dma.done [#allocation10], 2048
    $region69: #{tpu_custom_call.1} parent=1 // pred_fallthru
      _
    %v111 = vld [vmem:[%s1] sm:$0x3]
    %v112 = vld [vmem:[%s3] sm:$0x7]
    %v113 = vld [vmem:[#allocation3] sm:$0xff]
    %v114 = vld [vmem:[#allocation3 + $0x8] sm:$0xff]
    %v115 = vlaneseq
    %v116 = vshrl.u32 %v115, 7
    %v117 = vsub.s32 0, %v116
    %v118 = vrot.slane %v112, %v117
    %vm119 = vcmask 130048
    %v121 = vsel %vm119, %v111, 0
    %123 = vmatprep.subr.mxu0 0.0
    %124 = vmatpush1.msra.mxu0 %v113
    %125 = vmatprep.subr.mxu0 0.0
    %126 = vmatpush1.msra.mxu0 %v114
    %127 = vmatprep.subr.mxu0 0.0
    %128 = vmatpush1.msra.mxu0 0.0
    %129 = vmatprep.subr.mxu0 0.0
    %130 = vmatpush1.msra.mxu0 0.0
    %131 = vmatprep.subr.mxu0 0.0
    %132 = vmatpush1.msra.mxu0 0.0
    %133 = vmatprep.subr.mxu0 0.0
    %134 = vmatpush1.msra.mxu0 0.0
    %135 = vmatprep.subr.mxu0 0.0
    %136 = vmatpush1.msra.mxu0 0.0
    %137 = vmatprep.subr.mxu0 0.0
    %138 = vmatpush1.msra.mxu0 0.0
    %139 = vmatprep.subr.mxu0 0.0
    %140 = vmatpush1.msra.mxu0 0.0
    %141 = vmatprep.subr.mxu0 0.0
    %142 = vmatpush1.msra.mxu0 0.0
    %143 = vmatprep.subr.mxu0 0.0
    %144 = vmatpush1.msra.mxu0 0.0
    %145 = vmatprep.subr.mxu0 0.0
    %146 = vmatpush1.msra.mxu0 0.0
    %147 = vmatprep.subr.mxu0 0.0
    %148 = vmatpush1.msra.mxu0 0.0
    %149 = vmatprep.subr.mxu0 0.0
    %150 = vmatpush1.msra.mxu0 0.0
    %151 = vmatprep.subr.mxu0 0.0
    %152 = vmatpush1.msra.mxu0 0.0
    %153 = vmatprep.subr.mxu0 0.0
    %154 = vmatpush1.msra.mxu0 0.0
    %155 = vmatprep.subr.mxu0 0.0
    %156 = vmatpush1.msra.mxu0 0.0
    %157 = vmatprep.subr.mxu0 0.0
    %158 = vmatpush1.msra.mxu0 0.0
    %159 = vmatprep.subr.mxu0 0.0
    %160 = vmatpush1.msra.mxu0 0.0
    %161 = vmatprep.subr.mxu0 0.0
    %162 = vmatpush1.msra.mxu0 0.0
    %163 = vmatprep.subr.mxu0 0.0
    %164 = vmatpush1.msra.mxu0 0.0
    %165 = vmatprep.subr.mxu0 0.0
    %166 = vmatpush1.msra.mxu0 0.0
    %167 = vmatprep.subr.mxu0 0.0
    %168 = vmatpush1.msra.mxu0 0.0
    %169 = vmatprep.subr.mxu0 0.0
    %170 = vmatpush1.msra.mxu0 0.0
    %171 = vmatprep.subr.mxu0 0.0
    %172 = vmatpush1.msra.mxu0 0.0
    %173 = vmatprep.subr.mxu0 0.0
    %174 = vmatpush1.msra.mxu0 0.0
    %175 = vmatprep.subr.mxu0 0.0
    %176 = vmatpush1.msra.mxu0 0.0
    %177 = vmatprep.subr.mxu0 0.0
    %178 = vmatpush1.msra.mxu0 0.0
    %179 = vmatprep.subr.mxu0 0.0
    %180 = vmatpush1.msra.mxu0 0.0
    %181 = vmatprep.subr.mxu0 0.0
    %182 = vmatpush1.msra.mxu0 0.0
    %183 = vmatprep.subr.mxu0 0.0
    %184 = vmatpush1.msra.mxu0 0.0
    %185 = vmatprep.subr.mxu0 0.0
    %186 = vmatpush1.msra.mxu0 0.0
    %187 = vmatprep.mubr.f32.mxu0 0.0
    %188 = vmatmul.mubr.f32.gmra.mrb[0].mxu0 %v121
    %v189 = vpop.f32.mrb[0].mxu0
    %v190 = vadd.f32 %v118, %v189
    %v191 = vpop.f32.mrb[0].mxu0
    %192 = vdwg.mxu0
    %v193 = vmax.f32 %v190, 0.0
    %vm194 = vcmask 1041408
    %v195 = vsel %vm194, %v193, 0.0
    %196 = vadd.xlane.f32.xlu0 %v195
    %v197 = vpop.xlane.xlu0 %196
    %v198 = vmul.f32 %v193, %v193
    %v199 = vsel %vm194, %v198, 0.0
    %200 = vadd.xlane.f32.xlu0 %v199
    %v201 = vpop.xlane.xlu0 %200
    %v202 = vmul.f32 %v197, 0.03125
    %v203 = vmul.f32 %v201, 0.03125
    %v204 = vmul.f32 %v202, %v202
    %v205 = vsub.f32 %v203, %v204
    %v206 = vmax.f32 %v205, 0.0
    %v207 = vsub.f32 %v193, %v202
    %v208 = vadd.f32 %v206, 1e-05
    %v209 = vrsqrt.pop %v208
    %v210 = vmul.f32 %v207, %v209
    %v211 = vlaneseq
    %v212 = vshrl.u32 %v211, 7
    %v213 = vsub.s32 1, %v212
    %v214 = vrot.slane %v112, %v213
    %v215 = vmul.f32 %v210, %v214
    %v216 = vlaneseq
    %v217 = vshrl.u32 %v216, 7
    %v218 = vsub.s32 2, %v217
    %v219 = vrot.slane %v112, %v218
    %v220 = vadd.f32 %v215, %v219
    %v221 = vld [vmem:[%s5] sm:$0x7]
    %v222 = vld [vmem:[#allocation6] sm:$0xff]
    %v223 = vld [vmem:[#allocation6 + $0x8] sm:$0xff]
    %v224 = vld [vmem:[#allocation6 + $0x10] sm:$0xff]
    %v225 = vld [vmem:[#allocation6 + $0x18] sm:$0xff]
    %v226 = vld [vmem:[#allocation6 + $0x20] sm:$0xff]
    %v227 = vld [vmem:[#allocation6 + $0x28] sm:$0xff]
    %v228 = vld [vmem:[#allocation6 + $0x30] sm:$0xff]
    %v229 = vld [vmem:[#allocation6 + $0x38] sm:$0xff]
    %v230 = vld [vmem:[#allocation6 + $0x40] sm:$0xff]
    %v231 = vld [vmem:[#allocation6 + $0x48] sm:$0xff]
    %v232 = vld [vmem:[#allocation6 + $0x50] sm:$0xff]
    %v233 = vld [vmem:[#allocation6 + $0x58] sm:$0xff]
    %v234 = vld [vmem:[#allocation6 + $0x60] sm:$0xff]
    %v235 = vld [vmem:[#allocation6 + $0x68] sm:$0xff]
    %v236 = vld [vmem:[#allocation6 + $0x70] sm:$0xff]
    %v237 = vld [vmem:[#allocation6 + $0x78] sm:$0xff]
    %v238 = vlaneseq
    %v239 = vshrl.u32 %v238, 7
    %v240 = vsub.s32 0, %v239
    %v241 = vrot.slane %v221, %v240
    %242 = vmatprep.subr.mxu0 0.0
    %243 = vmatpush1.msra.mxu0 %v222
    %244 = vmatprep.subr.mxu0 0.0
    %245 = vmatpush1.msra.mxu0 %v223
    %246 = vmatprep.subr.mxu0 0.0
    %247 = vmatpush1.msra.mxu0 %v224
    %248 = vmatprep.subr.mxu0 0.0
    %249 = vmatpush1.msra.mxu0 %v225
    %250 = vmatprep.subr.mxu0 0.0
    %251 = vmatpush1.msra.mxu0 %v226
    %252 = vmatprep.subr.mxu0 0.0
    %253 = vmatpush1.msra.mxu0 %v227
    %254 = vmatprep.subr.mxu0 0.0
    %255 = vmatpush1.msra.mxu0 %v228
    %256 = vmatprep.subr.mxu0 0.0
    %257 = vmatpush1.msra.mxu0 %v229
    %258 = vmatprep.subr.mxu0 0.0
    %259 = vmatpush1.msra.mxu0 %v230
    %260 = vmatprep.subr.mxu0 0.0
    %261 = vmatpush1.msra.mxu0 %v231
    %262 = vmatprep.subr.mxu0 0.0
    %263 = vmatpush1.msra.mxu0 %v232
    %264 = vmatprep.subr.mxu0 0.0
    %265 = vmatpush1.msra.mxu0 %v233
    %266 = vmatprep.subr.mxu0 0.0
    %267 = vmatpush1.msra.mxu0 %v234
    %268 = vmatprep.subr.mxu0 0.0
    %269 = vmatpush1.msra.mxu0 %v235
    %270 = vmatprep.subr.mxu0 0.0
    %271 = vmatpush1.msra.mxu0 %v236
    %272 = vmatprep.subr.mxu0 0.0
    %273 = vmatpush1.msra.mxu0 %v237
    %274 = vmatprep.subr.mxu0 0.0
    %275 = vmatpush1.msra.mxu0 0.0
    %276 = vmatprep.subr.mxu0 0.0
    %277 = vmatpush1.msra.mxu0 0.0
    %278 = vmatprep.subr.mxu0 0.0
    %279 = vmatpush1.msra.mxu0 0.0
    %280 = vmatprep.subr.mxu0 0.0
    %281 = vmatpush1.msra.mxu0 0.0
    %282 = vmatprep.subr.mxu0 0.0
    %283 = vmatpush1.msra.mxu0 0.0
    %284 = vmatprep.subr.mxu0 0.0
    %285 = vmatpush1.msra.mxu0 0.0
    %286 = vmatprep.subr.mxu0 0.0
    %287 = vmatpush1.msra.mxu0 0.0
    %288 = vmatprep.subr.mxu0 0.0
    %289 = vmatpush1.msra.mxu0 0.0
    %290 = vmatprep.subr.mxu0 0.0
    %291 = vmatpush1.msra.mxu0 0.0
    %292 = vmatprep.subr.mxu0 0.0
    %293 = vmatpush1.msra.mxu0 0.0
    %294 = vmatprep.subr.mxu0 0.0
    %295 = vmatpush1.msra.mxu0 0.0
    %296 = vmatprep.subr.mxu0 0.0
    %297 = vmatpush1.msra.mxu0 0.0
    %298 = vmatprep.subr.mxu0 0.0
    %299 = vmatpush1.msra.mxu0 0.0
    %300 = vmatprep.subr.mxu0 0.0
    %301 = vmatpush1.msra.mxu0 0.0
    %302 = vmatprep.subr.mxu0 0.0
    %303 = vmatpush1.msra.mxu0 0.0
    %304 = vmatprep.subr.mxu0 0.0
    %305 = vmatpush1.msra.mxu0 0.0
    %306 = vmatprep.mubr.f32.mxu0 0.0
    %307 = vmatmul.mubr.f32.gmra.mrb[0].mxu0 %v220
    %v308 = vpop.f32.mrb[0].mxu0
    %v309 = vadd.f32 %v241, %v308
    %v310 = vpop.f32.mrb[0].mxu0
    %311 = vdwg.mxu0
    %v312 = vmax.f32 %v309, 0.0
    %v313 = vsel %vm194, %v312, 0.0
    %314 = vadd.xlane.f32.xlu0 %v313
    %v315 = vpop.xlane.xlu0 %314
    %v316 = vmul.f32 %v312, %v312
    %v317 = vsel %vm194, %v316, 0.0
    %318 = vadd.xlane.f32.xlu0 %v317
    %v319 = vpop.xlane.xlu0 %318
    %v320 = vmul.f32 %v315, 0.0625
    %v321 = vmul.f32 %v319, 0.0625
    %v322 = vmul.f32 %v320, %v320
    %v323 = vsub.f32 %v321, %v322
    %v324 = vmax.f32 %v323, 0.0
    %v325 = vsub.f32 %v312, %v320
    %v326 = vadd.f32 %v324, 1e-05
    %v327 = vrsqrt.pop %v326
    %v328 = vmul.f32 %v325, %v327
    %v329 = vlaneseq
    %v330 = vshrl.u32 %v329, 7
    %v331 = vsub.s32 1, %v330
    %v332 = vrot.slane %v221, %v331
    %v333 = vmul.f32 %v328, %v332
    %v334 = vlaneseq
    %v335 = vshrl.u32 %v334, 7
    %v336 = vsub.s32 2, %v335
    %v337 = vrot.slane %v221, %v336
    %v338 = vadd.f32 %v333, %v337
    %v339 = vld [vmem:[%s7] sm:$0x7]
    %v340 = vld [vmem:[#allocation8] sm:$0xff]
    %v341 = vld [vmem:[#allocation8 + $0x8] sm:$0xff]
    %v342 = vld [vmem:[#allocation8 + $0x10] sm:$0xff]
    %v343 = vld [vmem:[#allocation8 + $0x18] sm:$0xff]
    %v344 = vld [vmem:[#allocation8 + $0x20] sm:$0xff]
    %v345 = vld [vmem:[#allocation8 + $0x28] sm:$0xff]
    %v346 = vld [vmem:[#allocation8 + $0x30] sm:$0xff]
    %v347 = vld [vmem:[#allocation8 + $0x38] sm:$0xff]
    %v348 = vld [vmem:[#allocation8 + $0x40] sm:$0xff]
    %v349 = vld [vmem:[#allocation8 + $0x48] sm:$0xff]
    %v350 = vld [vmem:[#allocation8 + $0x50] sm:$0xff]
    %v351 = vld [vmem:[#allocation8 + $0x58] sm:$0xff]
    %v352 = vld [vmem:[#allocation8 + $0x60] sm:$0xff]
    %v353 = vld [vmem:[#allocation8 + $0x68] sm:$0xff]
    %v354 = vld [vmem:[#allocation8 + $0x70] sm:$0xff]
    %v355 = vld [vmem:[#allocation8 + $0x78] sm:$0xff]
    %v356 = vlaneseq
    %v357 = vshrl.u32 %v356, 7
    %v358 = vsub.s32 0, %v357
    %v359 = vrot.slane %v339, %v358
    %360 = vmatprep.subr.mxu0 0.0
    %361 = vmatpush1.msra.mxu0 %v340
    %362 = vmatprep.subr.mxu0 0.0
    %363 = vmatpush1.msra.mxu0 %v341
    %364 = vmatprep.subr.mxu0 0.0
    %365 = vmatpush1.msra.mxu0 %v342
    %366 = vmatprep.subr.mxu0 0.0
    %367 = vmatpush1.msra.mxu0 %v343
    %368 = vmatprep.subr.mxu0 0.0
    %369 = vmatpush1.msra.mxu0 %v344
    %370 = vmatprep.subr.mxu0 0.0
    %371 = vmatpush1.msra.mxu0 %v345
    %372 = vmatprep.subr.mxu0 0.0
    %373 = vmatpush1.msra.mxu0 %v346
    %374 = vmatprep.subr.mxu0 0.0
    %375 = vmatpush1.msra.mxu0 %v347
    %376 = vmatprep.subr.mxu0 0.0
    %377 = vmatpush1.msra.mxu0 %v348
    %378 = vmatprep.subr.mxu0 0.0
    %379 = vmatpush1.msra.mxu0 %v349
    %380 = vmatprep.subr.mxu0 0.0
    %381 = vmatpush1.msra.mxu0 %v350
    %382 = vmatprep.subr.mxu0 0.0
    %383 = vmatpush1.msra.mxu0 %v351
    %384 = vmatprep.subr.mxu0 0.0
    %385 = vmatpush1.msra.mxu0 %v352
    %386 = vmatprep.subr.mxu0 0.0
    %387 = vmatpush1.msra.mxu0 %v353
    %388 = vmatprep.subr.mxu0 0.0
    %389 = vmatpush1.msra.mxu0 %v354
    %390 = vmatprep.subr.mxu0 0.0
    %391 = vmatpush1.msra.mxu0 %v355
    %392 = vmatprep.subr.mxu0 0.0
    %393 = vmatpush1.msra.mxu0 0.0
    %394 = vmatprep.subr.mxu0 0.0
    %395 = vmatpush1.msra.mxu0 0.0
    %396 = vmatprep.subr.mxu0 0.0
    %397 = vmatpush1.msra.mxu0 0.0
    %398 = vmatprep.subr.mxu0 0.0
    %399 = vmatpush1.msra.mxu0 0.0
    %400 = vmatprep.subr.mxu0 0.0
    %401 = vmatpush1.msra.mxu0 0.0
    %402 = vmatprep.subr.mxu0 0.0
    %403 = vmatpush1.msra.mxu0 0.0
    %404 = vmatprep.subr.mxu0 0.0
    %405 = vmatpush1.msra.mxu0 0.0
    %406 = vmatprep.subr.mxu0 0.0
    %407 = vmatpush1.msra.mxu0 0.0
    %408 = vmatprep.subr.mxu0 0.0
    %409 = vmatpush1.msra.mxu0 0.0
    %410 = vmatprep.subr.mxu0 0.0
    %411 = vmatpush1.msra.mxu0 0.0
    %412 = vmatprep.subr.mxu0 0.0
    %413 = vmatpush1.msra.mxu0 0.0
    %414 = vmatprep.subr.mxu0 0.0
    %415 = vmatpush1.msra.mxu0 0.0
    %416 = vmatprep.subr.mxu0 0.0
    %417 = vmatpush1.msra.mxu0 0.0
    %418 = vmatprep.subr.mxu0 0.0
    %419 = vmatpush1.msra.mxu0 0.0
    %420 = vmatprep.subr.mxu0 0.0
    %421 = vmatpush1.msra.mxu0 0.0
    %422 = vmatprep.subr.mxu0 0.0
    %423 = vmatpush1.msra.mxu0 0.0
    %424 = vmatprep.mubr.f32.mxu0 0.0
    %425 = vmatmul.mubr.f32.gmra.mrb[0].mxu0 %v338
    %v426 = vpop.f32.mrb[0].mxu0
    %v427 = vadd.f32 %v359, %v426
    %v428 = vpop.f32.mrb[0].mxu0
    %429 = vdwg.mxu0
    %v430 = vmax.f32 %v427, 0.0
    %v431 = vsel %vm194, %v430, 0.0
    %432 = vadd.xlane.f32.xlu0 %v431
    %v433 = vpop.xlane.xlu0 %432
    %v434 = vmul.f32 %v430, %v430
    %v435 = vsel %vm194, %v434, 0.0
    %436 = vadd.xlane.f32.xlu0 %v435
    %v437 = vpop.xlane.xlu0 %436
    %v438 = vmul.f32 %v433, 0.125
    %v439 = vmul.f32 %v437, 0.125
    %v440 = vmul.f32 %v438, %v438
    %v441 = vsub.f32 %v439, %v440
    %v442 = vmax.f32 %v441, 0.0
    %v443 = vsub.f32 %v430, %v438
    %v444 = vadd.f32 %v442, 1e-05
    %v445 = vrsqrt.pop %v444
    %v446 = vmul.f32 %v443, %v445
    %v447 = vlaneseq
    %v448 = vshrl.u32 %v447, 7
    %v449 = vsub.s32 1, %v448
    %v450 = vrot.slane %v339, %v449
    %v451 = vmul.f32 %v446, %v450
    %v452 = vlaneseq
    %v453 = vshrl.u32 %v452, 7
    %v454 = vsub.s32 2, %v453
    %v455 = vrot.slane %v339, %v454
    %v456 = vadd.f32 %v451, %v455
    %v457 = vld [vmem:[%s9] sm:$0x7]
    %v458 = vld [vmem:[#allocation9] sm:$0xff]
    %v459 = vld [vmem:[#allocation9 + $0x8] sm:$0xff]
    %v460 = vld [vmem:[#allocation9 + $0x10] sm:$0xff]
    %v461 = vld [vmem:[#allocation9 + $0x18] sm:$0xff]
    %v462 = vld [vmem:[#allocation9 + $0x20] sm:$0xff]
    %v463 = vld [vmem:[#allocation9 + $0x28] sm:$0xff]
    %v464 = vld [vmem:[#allocation9 + $0x30] sm:$0xff]
    %v465 = vld [vmem:[#allocation9 + $0x38] sm:$0xff]
    %v466 = vld [vmem:[#allocation9 + $0x40] sm:$0xff]
    %v467 = vld [vmem:[#allocation9 + $0x48] sm:$0xff]
    %v468 = vld [vmem:[#allocation9 + $0x50] sm:$0xff]
    %v469 = vld [vmem:[#allocation9 + $0x58] sm:$0xff]
    %v470 = vld [vmem:[#allocation9 + $0x60] sm:$0xff]
    %v471 = vld [vmem:[#allocation9 + $0x68] sm:$0xff]
    %v472 = vld [vmem:[#allocation9 + $0x70] sm:$0xff]
    %v473 = vld [vmem:[#allocation9 + $0x78] sm:$0xff]
    %v474 = vlaneseq
    %v475 = vshrl.u32 %v474, 7
    %v476 = vsub.s32 0, %v475
    %v477 = vrot.slane %v457, %v476
    %478 = vmatprep.subr.mxu0 0.0
    %479 = vmatpush1.msra.mxu0 %v458
    %480 = vmatprep.subr.mxu0 0.0
    %481 = vmatpush1.msra.mxu0 %v459
    %482 = vmatprep.subr.mxu0 0.0
    %483 = vmatpush1.msra.mxu0 %v460
    %484 = vmatprep.subr.mxu0 0.0
    %485 = vmatpush1.msra.mxu0 %v461
    %486 = vmatprep.subr.mxu0 0.0
    %487 = vmatpush1.msra.mxu0 %v462
    %488 = vmatprep.subr.mxu0 0.0
    %489 = vmatpush1.msra.mxu0 %v463
    %490 = vmatprep.subr.mxu0 0.0
    %491 = vmatpush1.msra.mxu0 %v464
    %492 = vmatprep.subr.mxu0 0.0
    %493 = vmatpush1.msra.mxu0 %v465
    %494 = vmatprep.subr.mxu0 0.0
    %495 = vmatpush1.msra.mxu0 %v466
    %496 = vmatprep.subr.mxu0 0.0
    %497 = vmatpush1.msra.mxu0 %v467
    %498 = vmatprep.subr.mxu0 0.0
    %499 = vmatpush1.msra.mxu0 %v468
    %500 = vmatprep.subr.mxu0 0.0
    %501 = vmatpush1.msra.mxu0 %v469
    %502 = vmatprep.subr.mxu0 0.0
    %503 = vmatpush1.msra.mxu0 %v470
    %504 = vmatprep.subr.mxu0 0.0
    %505 = vmatpush1.msra.mxu0 %v471
    %506 = vmatprep.subr.mxu0 0.0
    %507 = vmatpush1.msra.mxu0 %v472
    %508 = vmatprep.subr.mxu0 0.0
    %509 = vmatpush1.msra.mxu0 %v473
    %510 = vmatprep.subr.mxu0 0.0
    %511 = vmatpush1.msra.mxu0 0.0
    %512 = vmatprep.subr.mxu0 0.0
    %513 = vmatpush1.msra.mxu0 0.0
    %514 = vmatprep.subr.mxu0 0.0
    %515 = vmatpush1.msra.mxu0 0.0
    %516 = vmatprep.subr.mxu0 0.0
    %517 = vmatpush1.msra.mxu0 0.0
    %518 = vmatprep.subr.mxu0 0.0
    %519 = vmatpush1.msra.mxu0 0.0
    %520 = vmatprep.subr.mxu0 0.0
    %521 = vmatpush1.msra.mxu0 0.0
    %522 = vmatprep.subr.mxu0 0.0
    %523 = vmatpush1.msra.mxu0 0.0
    %524 = vmatprep.subr.mxu0 0.0
    %525 = vmatpush1.msra.mxu0 0.0
    %526 = vmatprep.subr.mxu0 0.0
    %527 = vmatpush1.msra.mxu0 0.0
    %528 = vmatprep.subr.mxu0 0.0
    %529 = vmatpush1.msra.mxu0 0.0
    %530 = vmatprep.subr.mxu0 0.0
    %531 = vmatpush1.msra.mxu0 0.0
    %532 = vmatprep.subr.mxu0 0.0
    %533 = vmatpush1.msra.mxu0 0.0
    %534 = vmatprep.subr.mxu0 0.0
    %535 = vmatpush1.msra.mxu0 0.0
    %536 = vmatprep.subr.mxu0 0.0
    %537 = vmatpush1.msra.mxu0 0.0
    %538 = vmatprep.subr.mxu0 0.0
    %539 = vmatpush1.msra.mxu0 0.0
    %540 = vmatprep.subr.mxu0 0.0
    %541 = vmatpush1.msra.mxu0 0.0
    %542 = vmatprep.mubr.f32.mxu0 0.0
    %543 = vmatmul.mubr.f32.gmra.mrb[0].mxu0 %v456
    %v544 = vpop.f32.mrb[0].mxu0
    %v545 = vadd.f32 %v477, %v544
    %v546 = vpop.f32.mrb[0].mxu0
    %547 = vdwg.mxu0
    %v548 = vmax.f32 %v545, 0.0
    %v549 = vsel %vm194, %v548, 0.0
    %550 = vadd.xlane.f32.xlu0 %v549
    %v551 = vpop.xlane.xlu0 %550
    %v552 = vmul.f32 %v548, %v548
    %v553 = vsel %vm194, %v552, 0.0
    %554 = vadd.xlane.f32.xlu0 %v553
    %v555 = vpop.xlane.xlu0 %554
    %v556 = vmul.f32 %v551, 0.25
    %v557 = vmul.f32 %v555, 0.25
    %v558 = vmul.f32 %v556, %v556
    %v559 = vsub.f32 %v557, %v558
    %v560 = vmax.f32 %v559, 0.0
    %v561 = vsub.f32 %v548, %v556
    %v562 = vadd.f32 %v560, 1e-05
    %v563 = vrsqrt.pop %v562
    %v564 = vmul.f32 %v561, %v563
    %v565 = vlaneseq
    %v566 = vshrl.u32 %v565, 7
    %v567 = vsub.s32 1, %v566
    %v568 = vrot.slane %v457, %v567
    %v569 = vmul.f32 %v564, %v568
    %v570 = vlaneseq
    %v571 = vshrl.u32 %v570, 7
    %v572 = vsub.s32 2, %v571
    %v573 = vrot.slane %v457, %v572
    %v574 = vadd.f32 %v569, %v573
    %v575 = vld [vmem:[%s11] sm:$0x3]
    %v576 = vld [vmem:[#allocation11] sm:$0xff]
    %v577 = vld [vmem:[#allocation11 + $0x8] sm:$0xff]
    %v578 = vld [vmem:[#allocation11 + $0x10] sm:$0xff]
    %v579 = vld [vmem:[#allocation11 + $0x18] sm:$0xff]
    %v580 = vld [vmem:[#allocation11 + $0x20] sm:$0xff]
    %v581 = vld [vmem:[#allocation11 + $0x28] sm:$0xff]
    %v582 = vld [vmem:[#allocation11 + $0x30] sm:$0xff]
    %v583 = vld [vmem:[#allocation11 + $0x38] sm:$0xff]
    %v584 = vld [vmem:[#allocation11 + $0x40] sm:$0xff]
    %v585 = vld [vmem:[#allocation11 + $0x48] sm:$0xff]
    %v586 = vld [vmem:[#allocation11 + $0x50] sm:$0xff]
    %v587 = vld [vmem:[#allocation11 + $0x58] sm:$0xff]
    %v588 = vld [vmem:[#allocation11 + $0x60] sm:$0xff]
    %v589 = vld [vmem:[#allocation11 + $0x68] sm:$0xff]
    %v590 = vld [vmem:[#allocation11 + $0x70] sm:$0xff]
    %v591 = vld [vmem:[#allocation11 + $0x78] sm:$0xff]
    %v592 = vlaneseq
    %v593 = vshrl.u32 %v592, 7
    %v594 = vsub.s32 0, %v593
    %v595 = vrot.slane %v575, %v594
    %596 = vmatprep.subr.mxu0 0.0
    %597 = vmatpush1.msra.mxu0 %v576
    %598 = vmatprep.subr.mxu0 0.0
    %599 = vmatpush1.msra.mxu0 %v577
    %600 = vmatprep.subr.mxu0 0.0
    %601 = vmatpush1.msra.mxu0 %v578
    %602 = vmatprep.subr.mxu0 0.0
    %603 = vmatpush1.msra.mxu0 %v579
    %604 = vmatprep.subr.mxu0 0.0
    %605 = vmatpush1.msra.mxu0 %v580
    %606 = vmatprep.subr.mxu0 0.0
    %607 = vmatpush1.msra.mxu0 %v581
    %608 = vmatprep.subr.mxu0 0.0
    %609 = vmatpush1.msra.mxu0 %v582
    %610 = vmatprep.subr.mxu0 0.0
    %611 = vmatpush1.msra.mxu0 %v583
    %612 = vmatprep.subr.mxu0 0.0
    %613 = vmatpush1.msra.mxu0 %v584
    %614 = vmatprep.subr.mxu0 0.0
    %615 = vmatpush1.msra.mxu0 %v585
    %616 = vmatprep.subr.mxu0 0.0
    %617 = vmatpush1.msra.mxu0 %v586
    %618 = vmatprep.subr.mxu0 0.0
    %619 = vmatpush1.msra.mxu0 %v587
    %620 = vmatprep.subr.mxu0 0.0
    %621 = vmatpush1.msra.mxu0 %v588
    %622 = vmatprep.subr.mxu0 0.0
    %623 = vmatpush1.msra.mxu0 %v589
    %624 = vmatprep.subr.mxu0 0.0
    %625 = vmatpush1.msra.mxu0 %v590
    %626 = vmatprep.subr.mxu0 0.0
    %627 = vmatpush1.msra.mxu0 %v591
    %628 = vmatprep.subr.mxu0 0.0
    %629 = vmatpush1.msra.mxu0 0.0
    %630 = vmatprep.subr.mxu0 0.0
    %631 = vmatpush1.msra.mxu0 0.0
    %632 = vmatprep.subr.mxu0 0.0
    %633 = vmatpush1.msra.mxu0 0.0
    %634 = vmatprep.subr.mxu0 0.0
    %635 = vmatpush1.msra.mxu0 0.0
    %636 = vmatprep.subr.mxu0 0.0
    %637 = vmatpush1.msra.mxu0 0.0
    %638 = vmatprep.subr.mxu0 0.0
    %639 = vmatpush1.msra.mxu0 0.0
    %640 = vmatprep.subr.mxu0 0.0
    %641 = vmatpush1.msra.mxu0 0.0
    %642 = vmatprep.subr.mxu0 0.0
    %643 = vmatpush1.msra.mxu0 0.0
    %644 = vmatprep.subr.mxu0 0.0
    %645 = vmatpush1.msra.mxu0 0.0
    %646 = vmatprep.subr.mxu0 0.0
    %647 = vmatpush1.msra.mxu0 0.0
    %648 = vmatprep.subr.mxu0 0.0
    %649 = vmatpush1.msra.mxu0 0.0
    %650 = vmatprep.subr.mxu0 0.0
    %651 = vmatpush1.msra.mxu0 0.0
    %652 = vmatprep.subr.mxu0 0.0
    %653 = vmatpush1.msra.mxu0 0.0
    %654 = vmatprep.subr.mxu0 0.0
    %655 = vmatpush1.msra.mxu0 0.0
    %656 = vmatprep.subr.mxu0 0.0
    %657 = vmatpush1.msra.mxu0 0.0
    %658 = vmatprep.subr.mxu0 0.0
    %659 = vmatpush1.msra.mxu0 0.0
    %660 = vmatprep.mubr.f32.mxu0 0.0
    %661 = vmatmul.mubr.f32.gmra.mrb[0].mxu0 %v574
    %v662 = vpop.f32.mrb[0].mxu0
    %v663 = vadd.f32 %v595, %v662
    %v664 = vpop.f32.mrb[0].mxu0
    %665 = vdwg.mxu0
    %v666 = vxor.u32 %v663, 2147483648
    %v667 = vmul.f32 %v666, 1.442695
    %v668 = vpow.pop %v667
    %v669 = vadd.f32 %v668, 1.0
    %v670 = vrcp.pop %v669
    %v671 = vmul.f32 1.0, %v670
    %v672 = vlaneseq
    %v673 = vshrl.u32 %v672, 7
    %v674 = vsub.s32 1, %v673
    %v675 = vrot.slane %v575, %v674
    %v676 = vadd.f32 %v663, %v675
    %v677 = vsel %vm194, %v676, -inf
    %678 = vmax.xlane.f32.xlu0 %v677
    %v679 = vpop.xlane.xlu0 %678
    %v680 = vsub.f32 %v676, %v679
    %v681 = vmul.f32 %v680, 1.442695
    %v682 = vpow.pop %v681
    %v683 = vsel %vm194, %v682, 0.0
    %684 = vadd.xlane.f32.xlu0 %v683
    %v685 = vpop.xlane.xlu0 %684
    %v686 = vrcp.pop %v685
    %v687 = vmul.f32 %v685, %v686
    %v688 = vsub.f32 2.0, %v687
    %v689 = vmul.f32 %v686, %v688
    %s690 = sld [smem:[#allocation2]]
    %v691 = vstv %s690
    %v692 = vmul.f32 %v671, %v691
    %v693 = vmul.f32 %v689, %v692
    %695 = vset.pattern.permute.xlu0 4
    %696 = vperm.xlu0 %695, %v693
    %v697 = vpop.permute.xlu0 %696
    %v699 = vmul.f32 %v682, %v697
    %vm700 = vcmask 25600
    %701 = vst.msk [vmem:[#allocation12] sm:$0x3] %vm700, %v699
    // Predicated region
    $region70: #{tpu_custom_call.1} parent=1 // pred_check
      _
    $region71: #{tpu_custom_call.1} parent=1 // pred_check_branch
      %703 = sbr.rel (0) target = $region73
    $region72: #{tpu_custom_call.1} parent=1 // pred_region
      %s705 = ssub.s32 32, 32
      %706 = vsyncadd [#allocation5], %s705
      %s708 = sshll.u32 [#allocation12], 4
      %s709 = int_to_ptr.vmem [resolvable:$true] %s708
      %711 = dma.vmem_to_hbm [thread:$0]  %s709, 32, %s12, [#allocation5]
    $region73: #{tpu_custom_call.1} parent=1 // pred_fallthru
      _
    // Predicated region
    $region74: #{tpu_custom_call.1} parent=1 // pred_check
      _
    $region75: #{tpu_custom_call.1} parent=1 // pred_check_branch
      %713 = sbr.rel (0) target = $region77
    $region76: #{tpu_custom_call.1} parent=1 // pred_region
      %714 = dma.done [#allocation5], 32
    $region77: #{tpu_custom_call.1} parent=1 // pred_fallthru
      _
    %715 = vsyncpa [#allocation4], 1
    %716 = vsyncpa [#allocation7], 1
    %717 = vsyncpa [#allocation10], 1
    %718 = vsyncpa [#allocation5], 1

</llo_original>
